<compile_context>
chip_gen: v7x
topology: tpu7x:2x2x1
jax: 0.10.0
libtpu: 0.0.40
codegen_flags: <defaults>
</compile_context>

<pallas_src>
import functools

import jax
import jax.numpy as jnp
from jax import lax
from jax.experimental import pallas as pl
from jax.experimental.pallas import tpu as pltpu

HIDDEN = 256


def _round_up(n, m):
    return ((n + m - 1) // m) * m


def _vmem_limit_bytes():
    """Per-chip scoped-VMEM budget: ~3/4 of physical, capped at 100 MiB.

    -> ~96 MiB on v5e/v6e (128 MiB physical), ~48 MiB on v7x (64 MiB physical).
    """
    cap = 64 * 1024 * 1024  # conservative fallback: v7x per-TensorCore VMEM
    try:
        cap = int(pltpu.get_tpu_info().vmem_capacity_bytes)
    except Exception:
        pass
    return max(32 * 1024 * 1024, min(cap * 3 // 4, 100 * 1024 * 1024))


def _vmem_estimate(TB, F, H=HIDDEN):
    """Rough VMEM bytes for one grid step (pipeline buffers + temporaries)."""
    x_stream = 2 * TB * F * 4                                   # f32 x tile, double-buffered
    weights = F * H * 2 + H * H * 2 + 2 * H * 4 + 8 * H * 2     # single-buffered residents
    out_stream = 2 * TB * 4                                     # (1, TB) f32, double-buffered
    temporaries = TB * F * 2 + 2 * TB * H * 4 + 8 * TB * 4      # bf16 x, h1/h2 f32, fc3 acc
    return x_stream + weights + out_stream + temporaries


def _pick_tile(B, F, tb, vmem_budget):
    # TB % 128 == 0 keeps the (1, TB) output stores lane-dense (unmasked vst)
    # and the MXU M-dimension cleanly tiled.
    TB = max(128, (int(tb) // 128) * 128)
    TB = min(TB, _round_up(B, 128))
    # v7x has 2 TensorCores; keep at least 2 batch tiles when the batch allows
    # so dimension_semantics=("parallel",) can shard them (no-op on v5e/v6e).
    if B >= 256:
        TB = min(TB, _round_up(-(-B // 2), 128))
    # Shrink until double-buffered x tiles + resident weights + temporaries fit
    # the scoped-VMEM budget (matters on v7x's 64 MiB and for large in_feature).
    while TB > 128 and _vmem_estimate(TB, F) > vmem_budget:
        TB -= 128
    return TB
    # TODO(synk): if in_feature is so large that W1 alone exceeds the VMEM
    # budget, add a feature (K) grid axis with an f32 accumulator scratch.


def adv_net_kernel(x_ref, w1_ref, b1_ref, w2_ref, b2_ref, w3_ref, b3_ref, o_ref):
    # GRL forward pass is the identity map (coeff only affects the backward pass).
    x = x_ref[...].astype(jnp.bfloat16)                              # (TB, F) bf16 (VPU cast)

    # fc1 + ReLU   (Dropout(0.5) is identity in eval mode)
    h1 = jnp.dot(x, w1_ref[...], preferred_element_type=jnp.float32) + b1_ref[...]
    h1 = jnp.maximum(h1, 0.0)                                        # (TB, 256) f32

    # fc2 + ReLU   (Dropout(0.5) is identity in eval mode)
    h2 = jnp.dot(h1.astype(jnp.bfloat16), w2_ref[...],
                 preferred_element_type=jnp.float32) + b2_ref[...]
    h2 = jnp.maximum(h2, 0.0)                                        # (TB, 256) f32

    # fc3 + Sigmoid.  bf16 NT matmul contracting the feature axis of BOTH
    # operands: (8,256) x (TB,256)^T -> (8,TB).  Batch lands on lanes, so the
    # output row is lane-dense; single MXU pass, no XLU transpose.  w3 is
    # zero-padded to 8 rows (sublane-aligned); only row 0 is real.
    logits = lax.dot_general(
        w3_ref[...], h2.astype(jnp.bfloat16),
        dimension_numbers=(((1,), (1,)), ((), ())),
        preferred_element_type=jnp.float32)                          # (8, TB)
    logits = logits[0:1, :] + b3_ref[0]                              # (1, TB), b3 from SMEM
    o_ref[...] = jax.nn.sigmoid(logits).astype(o_ref.dtype)
    # TODO(synk): training-mode Dropout (stochastic masking) and the GRL
    # backward pass (gradient reversal scaled by the aToBSheduler coeff) are
    # not implemented; wrap with jax.custom_vjp before using under grad.


def prepare_params(params):
    """One-time parameter prep (hoisted out of the per-call forward graph):
    bf16 casts for the MXU, sublane-padded fc3 row, SMEM-friendly b3."""
    w1, b1, w2, b2, w3, b3 = params
    w1_b = w1.astype(jnp.bfloat16)                                   # (F, 256)
    w2_b = w2.astype(jnp.bfloat16)                                   # (256, 256)
    w3_p = jnp.zeros((8, HIDDEN), jnp.bfloat16).at[0, :].set(
        w3.reshape(-1).astype(jnp.bfloat16))                         # (8, 256), row 0 real
    b1_r = b1.reshape(1, HIDDEN).astype(jnp.float32)
    b2_r = b2.reshape(1, HIDDEN).astype(jnp.float32)
    b3_r = b3.reshape(1).astype(jnp.float32)                         # SMEM scalar
    return (w1_b, b1_r, w2_b, b2_r, w3_p, b3_r)


@functools.partial(jax.jit, static_argnames=("tb",))
def adversarial_network_forward(x, prepared, *, tb=1024):
    """x: [B, in_feature] float32 -> y: [B, 1] float32 (eval-mode forward).

    `prepared` must come from prepare_params() (done once, not per call).
    """
    w1, b1, w2, b2, w3, b3 = prepared
    B, F = x.shape
    H = w1.shape[1]

    vmem_budget = _vmem_limit_bytes()
    TB = _pick_tile(B, F, tb, vmem_budget)
    n_tiles = -(-B // TB)          # cdiv; last tile may be ragged (partial block)
    B_out = n_tiles * TB           # output allocation only; no HBM input padding

    const = lambda i: (0, 0)
    resident = pl.Buffered(1)      # single-buffer the VMEM-resident weights/biases

    cost = pl.CostEstimate(
        flops=2 * B * (F * H + H * H + H),
        transcendentals=B,                                    # sigmoid exp per row
        bytes_accessed=B * F * 4 + (F * H + H * H) * 2 + 2 * H * 4 + B * 4,
    )

    out = pl.pallas_call(
        adv_net_kernel,
        out_shape=jax.ShapeDtypeStruct((1, B_out), jnp.float32),
        grid=(n_tiles,),
        in_specs=[
            pl.BlockSpec((TB, F), lambda i: (i, 0)),                       # x tile (streamed)
            pl.BlockSpec((F, H), const, pipeline_mode=resident),           # W1 (resident)
            pl.BlockSpec((1, H), const, pipeline_mode=resident),           # b1
            pl.BlockSpec((H, H), const, pipeline_mode=resident),           # W2
            pl.BlockSpec((1, H), const, pipeline_mode=resident),           # b2
            pl.BlockSpec((8, H), const, pipeline_mode=resident),           # W3 (padded rows)
            pl.BlockSpec(memory_space=pltpu.MemorySpace.SMEM),             # b3 scalar
        ],
        out_specs=pl.BlockSpec((1, TB), lambda i: (0, i)),                 # lane-dense out
        compiler_params=pltpu.CompilerParams(
            dimension_semantics=("parallel",),
            vmem_limit_bytes=vmem_budget,
        ),
        cost_estimate=cost,
    )(x, w1, b1, w2, b2, w3, b3)

    # Rows >= B in the padded output come from unspecified partial-block reads
    # (row-independent compute), so they are simply sliced away here.
    return out[0, :B].reshape(B, 1)


def init_params(key, in_feature):
    """nn.Linear-style init.  fc1/fc2 weights are stored transposed as
    [F_in, F_out] so the kernel computes y = x @ W + b; fc3 weight keeps
    PyTorch's natural (1, 256) row layout."""
    ks = jax.random.split(key, 6)

    def uniform(kk, shape, fan_in):
        bound = 1.0 / jnp.sqrt(fan_in)
        return jax.random.uniform(kk, shape, jnp.float32, -bound, bound)

    w1 = uniform(ks[0], (in_feature, HIDDEN), in_feature)
    b1 = uniform(ks[1], (1, HIDDEN), in_feature)
    w2 = uniform(ks[2], (HIDDEN, HIDDEN), HIDDEN)
    b2 = uniform(ks[3], (1, HIDDEN), HIDDEN)
    w3 = uniform(ks[4], (1, HIDDEN), HIDDEN)
    b3 = uniform(ks[5], (1, 1), HIDDEN)
    return (w1, b1, w2, b2, w3, b3)


def reference_forward(x, params):
    """Pure-JAX reference with the same bf16-matmul / f32-accumulate numerics
    (fc3 also in bf16, matching the kernel)."""
    w1, b1, w2, b2, w3, b3 = params
    bf = jnp.bfloat16
    h1 = jnp.maximum(
        jnp.dot(x.astype(bf), w1.astype(bf), preferred_element_type=jnp.float32) + b1, 0.0)
    h2 = jnp.maximum(
        jnp.dot(h1.astype(bf), w2.astype(bf), preferred_element_type=jnp.float32) + b2, 0.0)
    logits = jnp.dot(h2.astype(bf), w3.astype(bf).T,
                     preferred_element_type=jnp.float32) + b3
    return jax.nn.sigmoid(logits)


if __name__ == "__main__":
    in_feature = 64
    batch = 300   # deliberately NOT a multiple of the tile -> exercises the ragged last tile

    key = jax.random.PRNGKey(0)
    kx, kp = jax.random.split(key)
    x = jax.random.normal(kx, (batch, in_feature), jnp.float32)
    params = init_params(kp, in_feature)
    prepared = prepare_params(params)   # one-time weight prep, outside the jitted forward

    # tb=128 keeps the demo tiny while still exercising a 3-step grid with
    # single-buffered VMEM-resident weights and a partial last batch tile;
    # production callers leave the default tb=1024.
    y = adversarial_network_forward(x, prepared, tb=128)
    y = jax.block_until_ready(y)

    y_ref = reference_forward(x, params)
    assert y.shape == (batch, 1), y.shape
    assert jnp.allclose(y, y_ref, atol=2e-3, rtol=2e-3), (
        "mismatch vs pure-JAX reference: max abs diff "
        f"{float(jnp.max(jnp.abs(y - y_ref)))}")

    print("KERNEL_OK")
</pallas_src>

<mosaic_0001>
module attributes {stable_mosaic.version = 11 : i64} {
  func.func @adv_net_kernel(%arg0: i32, %arg1: memref<128x64xf32, #tpu.memory_space<vmem>>, %arg2: memref<64x256xbf16, #tpu.memory_space<vmem>>, %arg3: memref<1x256xf32, #tpu.memory_space<vmem>>, %arg4: memref<256x256xbf16, #tpu.memory_space<vmem>>, %arg5: memref<1x256xf32, #tpu.memory_space<vmem>>, %arg6: memref<8x256xbf16, #tpu.memory_space<vmem>>, %arg7: memref<1xf32, #tpu.memory_space<smem>>, %arg8: memref<1x128xf32, #tpu.memory_space<vmem>>) attributes {dimension_semantics = [#tpu.dimension_semantics<parallel>], iteration_bounds = array<i64: 3>, scalar_prefetch = 0 : i64, scratch_operands = 0 : i64, tpu.core_type = #tpu.core_type<tc>, window_params = [{transform_indices = @transform_0, window_bounds = array<i64: 128, 64>}, {pipeline_mode = #tpu.pipeline_mode<synchronous>, transform_indices = @transform_1, window_bounds = array<i64: 64, 256>}, {pipeline_mode = #tpu.pipeline_mode<synchronous>, transform_indices = @transform_2, window_bounds = array<i64: 1, 256>}, {pipeline_mode = #tpu.pipeline_mode<synchronous>, transform_indices = @transform_3, window_bounds = array<i64: 256, 256>}, {pipeline_mode = #tpu.pipeline_mode<synchronous>, transform_indices = @transform_4, window_bounds = array<i64: 1, 256>}, {pipeline_mode = #tpu.pipeline_mode<synchronous>, transform_indices = @transform_5, window_bounds = array<i64: 8, 256>}, {transform_indices = @transform_6, window_bounds = array<i64: 1>}, {transform_indices = @transform_7, window_bounds = array<i64: 1, 128>}]} {
    %c0 = arith.constant 0 : index
    %c0_0 = arith.constant 0 : index
    %0 = vector.load %arg1[%c0, %c0_0] : memref<128x64xf32, #tpu.memory_space<vmem>>, vector<128x64xf32>
    %1 = arith.truncf %0 : vector<128x64xf32> to vector<128x64xbf16>
    %c0_1 = arith.constant 0 : index
    %c0_2 = arith.constant 0 : index
    %2 = vector.load %arg2[%c0_1, %c0_2] : memref<64x256xbf16, #tpu.memory_space<vmem>>, vector<64x256xbf16>
    %cst = arith.constant dense<0.000000e+00> : vector<128x256xf32>
    %3 = tpu.matmul %1, %2, %cst {dimension_numbers = #tpu.dot_dimension_numbers<[1], [0], [0], [1], [0, 0, 1, 1], [], []>} : vector<128x64xbf16>, vector<64x256xbf16>, vector<128x256xf32> -> vector<128x256xf32>
    %c0_3 = arith.constant 0 : index
    %c0_4 = arith.constant 0 : index
    %4 = vector.load %arg3[%c0_3, %c0_4] : memref<1x256xf32, #tpu.memory_space<vmem>>, vector<1x256xf32>
    %5 = vector.broadcast %4 : vector<1x256xf32> to vector<128x256xf32>
    %6 = arith.addf %3, %5 : vector<128x256xf32>
    %cst_5 = arith.constant 0.000000e+00 : f32
    %7 = vector.broadcast %cst_5 : f32 to vector<128x256xf32>
    %8 = arith.maximumf %6, %7 : vector<128x256xf32>
    %9 = arith.truncf %8 : vector<128x256xf32> to vector<128x256xbf16>
    %c0_6 = arith.constant 0 : index
    %c0_7 = arith.constant 0 : index
    %10 = vector.load %arg4[%c0_6, %c0_7] : memref<256x256xbf16, #tpu.memory_space<vmem>>, vector<256x256xbf16>
    %cst_8 = arith.constant dense<0.000000e+00> : vector<128x256xf32>
    %11 = tpu.matmul %9, %10, %cst_8 {dimension_numbers = #tpu.dot_dimension_numbers<[1], [0], [0], [1], [0, 0, 1, 1], [], []>} : vector<128x256xbf16>, vector<256x256xbf16>, vector<128x256xf32> -> vector<128x256xf32>
    %c0_9 = arith.constant 0 : index
    %c0_10 = arith.constant 0 : index
    %12 = vector.load %arg5[%c0_9, %c0_10] : memref<1x256xf32, #tpu.memory_space<vmem>>, vector<1x256xf32>
    %13 = vector.broadcast %12 : vector<1x256xf32> to vector<128x256xf32>
    %14 = arith.addf %11, %13 : vector<128x256xf32>
    %cst_11 = arith.constant 0.000000e+00 : f32
    %15 = vector.broadcast %cst_11 : f32 to vector<128x256xf32>
    %16 = arith.maximumf %14, %15 : vector<128x256xf32>
    %c0_12 = arith.constant 0 : index
    %c0_13 = arith.constant 0 : index
    %17 = vector.load %arg6[%c0_12, %c0_13] : memref<8x256xbf16, #tpu.memory_space<vmem>>, vector<8x256xbf16>
    %18 = arith.truncf %16 : vector<128x256xf32> to vector<128x256xbf16>
    %cst_14 = arith.constant dense<0.000000e+00> : vector<8x128xf32>
    %19 = tpu.matmul %17, %18, %cst_14 {dimension_numbers = #tpu.dot_dimension_numbers<[1], [1], [0], [0], [0, 0, 1, 0], [], []>} : vector<8x256xbf16>, vector<128x256xbf16>, vector<8x128xf32> -> vector<8x128xf32>
    %20 = vector.extract_strided_slice %19 {offsets = [0, 0], sizes = [1, 128], strides = [1, 1]} : vector<8x128xf32> to vector<1x128xf32>
    %c0_15 = arith.constant 0 : index
    %21 = memref.load %arg7[%c0_15] : memref<1xf32, #tpu.memory_space<smem>>
    %22 = vector.broadcast %21 : f32 to vector<1x128xf32>
    %23 = arith.addf %20, %22 : vector<1x128xf32>
    %24 = arith.negf %23 : vector<1x128xf32>
    %25 = math.exp %24 : vector<1x128xf32>
    %cst_16 = arith.constant 1.000000e+00 : f32
    %26 = vector.broadcast %cst_16 : f32 to vector<1x128xf32>
    %27 = arith.addf %26, %25 : vector<1x128xf32>
    %28 = arith.divf %26, %27 : vector<1x128xf32>
    %c0_17 = arith.constant 0 : index
    %c0_18 = arith.constant 0 : index
    %29 = vector.load %arg8[%c0_17, %c0_18] : memref<1x128xf32, #tpu.memory_space<vmem>>, vector<1x128xf32>
    tpu.vector_store %arg8[%c0_17, %c0_18], %28 {strides = array<i32>} : memref<1x128xf32, #tpu.memory_space<vmem>>, vector<1x128xf32>,
    return
  }
  func.func @transform_0(%arg0: i32) -> (i32, i32) {
    %c0_i32 = arith.constant 0 : i32
    %c0_i32_0 = arith.constant 0 : i32
    return %arg0, %c0_i32 : i32, i32
  }
  func.func @transform_1(%arg0: i32) -> (i32, i32) {
    %c0_i32 = arith.constant 0 : i32
    %c0_i32_0 = arith.constant 0 : i32
    %c0_i32_1 = arith.constant 0 : i32
    return %c0_i32, %c0_i32_0 : i32, i32
  }
  func.func @transform_2(%arg0: i32) -> (i32, i32) {
    %c0_i32 = arith.constant 0 : i32
    %c0_i32_0 = arith.constant 0 : i32
    %c0_i32_1 = arith.constant 0 : i32
    return %c0_i32, %c0_i32_0 : i32, i32
  }
  func.func @transform_3(%arg0: i32) -> (i32, i32) {
    %c0_i32 = arith.constant 0 : i32
    %c0_i32_0 = arith.constant 0 : i32
    %c0_i32_1 = arith.constant 0 : i32
    return %c0_i32, %c0_i32_0 : i32, i32
  }
  func.func @transform_4(%arg0: i32) -> (i32, i32) {
    %c0_i32 = arith.constant 0 : i32
    %c0_i32_0 = arith.constant 0 : i32
    %c0_i32_1 = arith.constant 0 : i32
    return %c0_i32, %c0_i32_0 : i32, i32
  }
  func.func @transform_5(%arg0: i32) -> (i32, i32) {
    %c0_i32 = arith.constant 0 : i32
    %c0_i32_0 = arith.constant 0 : i32
    %c0_i32_1 = arith.constant 0 : i32
    return %c0_i32, %c0_i32_0 : i32, i32
  }
  func.func @transform_6(%arg0: i32) -> i32 {
    %c0_i32 = arith.constant 0 : i32
    %c0_i32_0 = arith.constant 0 : i32
    return %c0_i32 : i32
  }
  func.func @transform_7(%arg0: i32) -> (i32, i32) {
    %c0_i32 = arith.constant 0 : i32
    %c0_i32_0 = arith.constant 0 : i32
    return %c0_i32, %arg0 : i32, i32
  }
}

</mosaic_0001>

<llo_original>
// kernel: adversarial_network_forward.1
$region0: #{adversarial_network_forward.1}
  #allocation0 [shape = 'u32[]', space=smem, size = 0x4, offset = 0x4, fixed_abs, tag = 'smem constant byte address 0x4 - core index']
  #allocation1 [shape = 'u32[144,128]{1,0:T(1,128)}', space=vmem, size = 0x12000, scoped, tag = 'internal scratch']
  #allocation2 [shape = 'f32[1]{0:T(128)S(6)}', space=smem, size = 0x200, scoped, tag = 'scoped memory for adversarial_network_forward.1']
  %s0 = inlined_call_operand.vmem [shape: f32[300,64], index: 0, kind: input, shape index: {}]
  %s1 = inlined_call_operand.vmem [shape: bf16[64,256], index: 1, kind: input, shape index: {}]
  %s2 = inlined_call_operand.vmem [shape: f32[1,256], index: 2, kind: input, shape index: {}]
  %s3 = inlined_call_operand.vmem [shape: bf16[256,256], index: 3, kind: input, shape index: {}]
  %s4 = inlined_call_operand.vmem [shape: f32[1,256], index: 4, kind: input, shape index: {}]
  %s5 = inlined_call_operand.vmem [shape: bf16[8,256], index: 5, kind: input, shape index: {}]
  %s6 = inlined_call_operand.<no memory space> [shape: f32[1], index: 6, kind: input, shape index: {}]
  %s7 = inlined_call_operand.vmem [shape: f32[1,384], index: 7, kind: output, shape index: {}]
  %s8 = sld [smem:[#allocation0]]
  $region61: #{adversarial_network_forward.1} parent=0
    _
  %s10 = ssub.s32 1, %s8
  %s11 = scalar_select 0, %s10, %s8
  %12 = sst [smem:[#allocation2]] %s6
  loop: start=0, step=1, limit=5
  $region2: #{adversarial_network_forward.1} parent=0 // loop_pre_header
    _
  $region3: #{adversarial_network_forward.1} parent=0 // loop_header
    %s14 = sphi 0, %s18
    %p15 = scmp.ge.s32.totalorder %s14, 5
    %s24 = sphi 0, %s26
    %s27 = sphi 0, %s24
    %s28 = sphi 0, %s27
    %s44 = sphi 0, %s28
    %s48 = sphi 0, %s48
    %s50 = sphi 0, %s48
    %s51 = sphi 0, %s50
    %s65 = sphi 0, %s51
    %s69 = sphi 0, %s69
    %s71 = sphi 0, %s69
    %s72 = sphi 0, %s71
    %s86 = sphi 0, %s72
    %s90 = sphi 0, %s90
    %s92 = sphi 0, %s90
    %s93 = sphi 0, %s92
    %s107 = sphi 0, %s93
    %s111 = sphi 0, %s111
    %s113 = sphi 0, %s111
    %s114 = sphi 0, %s113
    %s128 = sphi 0, %s114
    %s132 = sphi 0, %s132
    %s134 = sphi 0, %s132
    %s135 = sphi 0, %s134
    %s149 = sphi 0, %s135
    %s153 = sphi 0, %s153
    %s155 = sphi 0, %s153
    %s156 = sphi 0, %s155
    %s170 = sphi 0, %s156
    %s176 = sphi 0, %s178
    %s179 = sphi 0, %s176
    %s180 = sphi 0, %s179
    %s196 = sphi 0, %s180
  $region4: #{adversarial_network_forward.1} parent=0 // loop_header_branch
    %17 = sbr.rel (%p15) target = $region8
  $region5: #{adversarial_network_forward.1} parent=0 // loop_body
    %s19 = ssub.s32 %s14, 1
    %s20 = ssub.s32 %s14, 2
    %s21 = sadd.s32 %s14, 1
    %s22 = ssub.s32 %s14, %s21
    %p23 = scmp.eq.s32.totalorder %s22, 0
    %s25 = sadd.s32 %s24, 1
    %s26 = scalar_select %p23, %s24, %s25
    %p29 = pneg %p23
    %p30 = scmp.eq.s32.totalorder %s14, 2
    %p31 = por %p29, %p30
    %p32 = scmp.ne.s32.totalorder %s24, %s27
    %p33 = scmp.eq.s32.totalorder %s14, 0
    %p34 = por %p32, %p33
    %p35 = scmp.ne.s32.totalorder %s24, %s27
    %p36 = scmp.eq.s32.totalorder %s19, 2
    %p37 = por %p35, %p36
    %p38 = scmp.ne.s32.totalorder %s27, %s28
    %p39 = scmp.eq.s32.totalorder %s19, 0
    %p40 = por %p38, %p39
    %p41 = scmp.ne.s32.totalorder %s27, %s28
    %p42 = scmp.eq.s32.totalorder %s20, 2
    %p43 = por %p41, %p42
    %p45 = scmp.ne.s32.totalorder %s28, %s44
    %p46 = scmp.eq.s32.totalorder %s20, 0
    %p47 = por %p45, %p46
    %s49 = sadd.s32 %s48, 1
    %p52 = scmp.eq.s32.totalorder %s14, 2
    %p53 = scmp.ne.s32.totalorder %s48, %s50
    %p54 = scmp.eq.s32.totalorder %s14, 0
    %p55 = por %p53, %p54
    %p56 = scmp.ne.s32.totalorder %s48, %s50
    %p57 = scmp.eq.s32.totalorder %s19, 2
    %p58 = por %p56, %p57
    %p59 = scmp.ne.s32.totalorder %s50, %s51
    %p60 = scmp.eq.s32.totalorder %s19, 0
    %p61 = por %p59, %p60
    %p62 = scmp.ne.s32.totalorder %s50, %s51
    %p63 = scmp.eq.s32.totalorder %s20, 2
    %p64 = por %p62, %p63
    %p66 = scmp.ne.s32.totalorder %s51, %s65
    %p67 = scmp.eq.s32.totalorder %s20, 0
    %p68 = por %p66, %p67
    %s70 = sadd.s32 %s69, 1
    %p73 = scmp.eq.s32.totalorder %s14, 2
    %p74 = scmp.ne.s32.totalorder %s69, %s71
    %p75 = scmp.eq.s32.totalorder %s14, 0
    %p76 = por %p74, %p75
    %p77 = scmp.ne.s32.totalorder %s69, %s71
    %p78 = scmp.eq.s32.totalorder %s19, 2
    %p79 = por %p77, %p78
    %p80 = scmp.ne.s32.totalorder %s71, %s72
    %p81 = scmp.eq.s32.totalorder %s19, 0
    %p82 = por %p80, %p81
    %p83 = scmp.ne.s32.totalorder %s71, %s72
    %p84 = scmp.eq.s32.totalorder %s20, 2
    %p85 = por %p83, %p84
    %p87 = scmp.ne.s32.totalorder %s72, %s86
    %p88 = scmp.eq.s32.totalorder %s20, 0
    %p89 = por %p87, %p88
    %s91 = sadd.s32 %s90, 1
    %p94 = scmp.eq.s32.totalorder %s14, 2
    %p95 = scmp.ne.s32.totalorder %s90, %s92
    %p96 = scmp.eq.s32.totalorder %s14, 0
    %p97 = por %p95, %p96
    %p98 = scmp.ne.s32.totalorder %s90, %s92
    %p99 = scmp.eq.s32.totalorder %s19, 2
    %p100 = por %p98, %p99
    %p101 = scmp.ne.s32.totalorder %s92, %s93
    %p102 = scmp.eq.s32.totalorder %s19, 0
    %p103 = por %p101, %p102
    %p104 = scmp.ne.s32.totalorder %s92, %s93
    %p105 = scmp.eq.s32.totalorder %s20, 2
    %p106 = por %p104, %p105
    %p108 = scmp.ne.s32.totalorder %s93, %s107
    %p109 = scmp.eq.s32.totalorder %s20, 0
    %p110 = por %p108, %p109
    %s112 = sadd.s32 %s111, 1
    %p115 = scmp.eq.s32.totalorder %s14, 2
    %p116 = scmp.ne.s32.totalorder %s111, %s113
    %p117 = scmp.eq.s32.totalorder %s14, 0
    %p118 = por %p116, %p117
    %p119 = scmp.ne.s32.totalorder %s111, %s113
    %p120 = scmp.eq.s32.totalorder %s19, 2
    %p121 = por %p119, %p120
    %p122 = scmp.ne.s32.totalorder %s113, %s114
    %p123 = scmp.eq.s32.totalorder %s19, 0
    %p124 = por %p122, %p123
    %p125 = scmp.ne.s32.totalorder %s113, %s114
    %p126 = scmp.eq.s32.totalorder %s20, 2
    %p127 = por %p125, %p126
    %p129 = scmp.ne.s32.totalorder %s114, %s128
    %p130 = scmp.eq.s32.totalorder %s20, 0
    %p131 = por %p129, %p130
    %s133 = sadd.s32 %s132, 1
    %p136 = scmp.eq.s32.totalorder %s14, 2
    %p137 = scmp.ne.s32.totalorder %s132, %s134
    %p138 = scmp.eq.s32.totalorder %s14, 0
    %p139 = por %p137, %p138
    %p140 = scmp.ne.s32.totalorder %s132, %s134
    %p141 = scmp.eq.s32.totalorder %s19, 2
    %p142 = por %p140, %p141
    %p143 = scmp.ne.s32.totalorder %s134, %s135
    %p144 = scmp.eq.s32.totalorder %s19, 0
    %p145 = por %p143, %p144
    %p146 = scmp.ne.s32.totalorder %s134, %s135
    %p147 = scmp.eq.s32.totalorder %s20, 2
    %p148 = por %p146, %p147
    %p150 = scmp.ne.s32.totalorder %s135, %s149
    %p151 = scmp.eq.s32.totalorder %s20, 0
    %p152 = por %p150, %p151
    %s154 = sadd.s32 %s153, 1
    %p157 = scmp.eq.s32.totalorder %s14, 2
    %p158 = scmp.ne.s32.totalorder %s153, %s155
    %p159 = scmp.eq.s32.totalorder %s14, 0
    %p160 = por %p158, %p159
    %p161 = scmp.ne.s32.totalorder %s153, %s155
    %p162 = scmp.eq.s32.totalorder %s19, 2
    %p163 = por %p161, %p162
    %p164 = scmp.ne.s32.totalorder %s155, %s156
    %p165 = scmp.eq.s32.totalorder %s19, 0
    %p166 = por %p164, %p165
    %p167 = scmp.ne.s32.totalorder %s155, %s156
    %p168 = scmp.eq.s32.totalorder %s20, 2
    %p169 = por %p167, %p168
    %p171 = scmp.ne.s32.totalorder %s156, %s170
    %p172 = scmp.eq.s32.totalorder %s20, 0
    %p173 = por %p171, %p172
    %s174 = ssub.s32 %s14, %s21
    %p175 = scmp.eq.s32.totalorder %s174, 0
    %s177 = sadd.s32 %s176, 1
    %s178 = scalar_select %p175, %s176, %s177
    %p181 = pneg %p175
    %p182 = scmp.eq.s32.totalorder %s14, 2
    %p183 = por %p181, %p182
    %p184 = scmp.ne.s32.totalorder %s176, %s179
    %p185 = scmp.eq.s32.totalorder %s14, 0
    %p186 = por %p184, %p185
    %p187 = scmp.ne.s32.totalorder %s176, %s179
    %p188 = scmp.eq.s32.totalorder %s19, 2
    %p189 = por %p187, %p188
    %p190 = scmp.ne.s32.totalorder %s179, %s180
    %p191 = scmp.eq.s32.totalorder %s19, 0
    %p192 = por %p190, %p191
    %p193 = scmp.ne.s32.totalorder %s179, %s180
    %p194 = scmp.eq.s32.totalorder %s20, 2
    %p195 = por %p193, %p194
    %p197 = scmp.ne.s32.totalorder %s180, %s196
    %p198 = scmp.eq.s32.totalorder %s20, 0
    %p199 = por %p197, %p198
    %p200 = scmp.le.s32.totalorder 1, %s14
    %p201 = scmp.lt.s32.totalorder %s14, 4
    %p202 = pnand %p200, %p201
    %p203 = pneg %p202
    // Predicated region
    $region9: #{adversarial_network_forward.1} parent=5 // pred_check
      _
    $region10: #{adversarial_network_forward.1} parent=5 // pred_check_branch
      %205 = sbr.rel (%p202) target = $region12
    $region11: #{adversarial_network_forward.1} parent=5 // pred_region
      %s206 = ssub.s32 %s14, 1
      // Predicated region
      $region13: #{adversarial_network_forward.1} parent=11 // pred_check
        %p207 = pneg %p61
      $region14: #{adversarial_network_forward.1} parent=11 // pred_check_branch
        %209 = sbr.rel (%p207) target = $region16
      $region15: #{adversarial_network_forward.1} parent=11 // pred_region
        _
      $region16: #{adversarial_network_forward.1} parent=11 // pred_fallthru
        _
      // Predicated region
      $region17: #{adversarial_network_forward.1} parent=11 // pred_check
        %p210 = pneg %p82
      $region18: #{adversarial_network_forward.1} parent=11 // pred_check_branch
        %212 = sbr.rel (%p210) target = $region20
      $region19: #{adversarial_network_forward.1} parent=11 // pred_region
        _
      $region20: #{adversarial_network_forward.1} parent=11 // pred_fallthru
        _
      // Predicated region
      $region21: #{adversarial_network_forward.1} parent=11 // pred_check
        %p213 = pneg %p103
      $region22: #{adversarial_network_forward.1} parent=11 // pred_check_branch
        %215 = sbr.rel (%p213) target = $region24
      $region23: #{adversarial_network_forward.1} parent=11 // pred_region
        _
      $region24: #{adversarial_network_forward.1} parent=11 // pred_fallthru
        _
      // Predicated region
      $region25: #{adversarial_network_forward.1} parent=11 // pred_check
        %p216 = pneg %p124
      $region26: #{adversarial_network_forward.1} parent=11 // pred_check_branch
        %218 = sbr.rel (%p216) target = $region28
      $region27: #{adversarial_network_forward.1} parent=11 // pred_region
        _
      $region28: #{adversarial_network_forward.1} parent=11 // pred_fallthru
        _
      // Predicated region
      $region29: #{adversarial_network_forward.1} parent=11 // pred_check
        %p219 = pneg %p145
      $region30: #{adversarial_network_forward.1} parent=11 // pred_check_branch
        %221 = sbr.rel (%p219) target = $region32
      $region31: #{adversarial_network_forward.1} parent=11 // pred_region
        _
      $region32: #{adversarial_network_forward.1} parent=11 // pred_fallthru
        _
      // Predicated region
      $region33: #{adversarial_network_forward.1} parent=11 // pred_check
        %p222 = pneg %p166
      $region34: #{adversarial_network_forward.1} parent=11 // pred_check_branch
        %224 = sbr.rel (%p222) target = $region36
      $region35: #{adversarial_network_forward.1} parent=11 // pred_region
        _
      $region36: #{adversarial_network_forward.1} parent=11 // pred_fallthru
        _
    $region12: #{adversarial_network_forward.1} parent=5 // pred_fallthru
      _
    %p225 = scmp.lt.s32.totalorder %s14, 3
    // Predicated region
    $region37: #{adversarial_network_forward.1} parent=5 // pred_check
      %p226 = pneg %p225
    $region38: #{adversarial_network_forward.1} parent=5 // pred_check_branch
      %228 = sbr.rel (%p226) target = $region40
    $region39: #{adversarial_network_forward.1} parent=5 // pred_region
      // Predicated region
      $region41: #{adversarial_network_forward.1} parent=39 // pred_check
        %p229 = pneg %p34
      $region42: #{adversarial_network_forward.1} parent=39 // pred_check_branch
        %231 = sbr.rel (%p229) target = $region44
      $region43: #{adversarial_network_forward.1} parent=39 // pred_region
        %s232 = smul.u32 16, %s14
        %s233 = ssub.s32 38, %s232
        %p234 = scmp.lt.s32.totalorder %s233, 16
        %s235 = scalar_select %p234, %s233, 16
        %s236 = smul.u32 128, %s235
        %p237 = scmp.lt.s32.totalorder %s232, 37
        %s238 = scalar_select %p237, %s232, 37
        %s239 = smul.addr %s238, 8
        %s240 = scalar_lea.vmem %s0, %s239
        %s241 = smul.u32 16, %s14
        %s242 = ssub.s32 38, %s241
        %p243 = scmp.lt.s32.totalorder %s242, 16
        %s244 = scalar_select %p243, %s242, 16
        %s245 = smul.u32 128, %s244
      $region44: #{adversarial_network_forward.1} parent=39 // pred_fallthru
        _
    $region40: #{adversarial_network_forward.1} parent=5 // pred_fallthru
      _
    %p246 = scmp.le.s32.totalorder 1, %s14
    %p247 = scmp.lt.s32.totalorder %s14, 4
    %p248 = pnand %p246, %p247
    %p249 = pneg %p248
    // Predicated region
    $region45: #{adversarial_network_forward.1} parent=5 // pred_check
      _
    $region46: #{adversarial_network_forward.1} parent=5 // pred_check_branch
      %251 = sbr.rel (%p248) target = $region48
    $region47: #{adversarial_network_forward.1} parent=5 // pred_region
      %s252 = ssub.s32 %s14, 1
      %s253 = smul.u32 16, %s19
      %s254 = ssub.s32 38, %s253
      %p255 = scmp.lt.s32.totalorder %s254, 16
      %s256 = scalar_select %p255, %s254, 16
      %s257 = smul.u32 128, %s256
      %p258 = scmp.lt.s32.totalorder %s253, 37
      %s259 = scalar_select %p258, %s253, 37
      %s260 = smul.addr %s259, 8
      %s261 = scalar_lea.vmem %s0, %s260
      %p262 = pneg %p40
      %p263 = pneg %p37
      %p264 = pneg %p61
      %p265 = pneg %p58
      %p266 = pneg %p82
      %p267 = pneg %p79
      %p268 = pneg %p103
      %p269 = pneg %p100
      %p270 = pneg %p124
      %p271 = pneg %p121
      %p272 = pneg %p145
      %p273 = pneg %p142
      %p274 = pneg %p166
      %p275 = pneg %p163
      %p276 = pneg %p192
      %p277 = pneg %p189
      %p278 = scmp.lt.s32.totalorder %s19, 2
      %s279 = scalar_select %p278, %s19, 2
      %s280 = scalar_lea.vmem %s7, %s279
      %s281 = smul.u32 16, %s19
      %s282 = ssub.s32 38, %s281
      %p283 = scmp.lt.s32.totalorder %s282, 16
      %s284 = scalar_select %p283, %s282, 16
      %s285 = smul.u32 128, %s284
      %p286 = scmp.lt.s32.totalorder %s281, 37
      %s287 = scalar_select %p286, %s281, 37
      %s288 = smul.addr %s287, 8
      %s289 = scalar_lea.vmem %s0, %s288
      %s290 = smul.u32 16, %s19
      %s291 = ssub.s32 38, %s290
      %p292 = scmp.lt.s32.totalorder %s291, 16
      %s293 = scalar_select %p292, %s291, 16
      %s294 = smul.u32 128, %s293
      %p295 = scmp.lt.s32.totalorder %s19, 2
      %s296 = scalar_select %p295, %s19, 2
      %s297 = scalar_lea.vmem %s7, %s296
      %v299 = vld [vmem:[%s289] sm:$0xff]
      %v300 = vld [vmem:[%s289 + $0x8] sm:$0xff]
      %v301 = vld [vmem:[%s289 + $0x10] sm:$0xff]
      %v302 = vld [vmem:[%s289 + $0x18] sm:$0xff]
      %v303 = vld [vmem:[%s289 + $0x20] sm:$0xff]
      %v304 = vld [vmem:[%s289 + $0x28] sm:$0xff]
      %v305 = vld [vmem:[%s289 + $0x30] sm:$0xff]
      %v306 = vld [vmem:[%s289 + $0x38] sm:$0xff]
      %v307 = vld [vmem:[%s289 + $0x40] sm:$0xff]
      %v308 = vld [vmem:[%s289 + $0x48] sm:$0xff]
      %v309 = vld [vmem:[%s289 + $0x50] sm:$0xff]
      %v310 = vld [vmem:[%s289 + $0x58] sm:$0xff]
      %v311 = vld [vmem:[%s289 + $0x60] sm:$0xff]
      %v312 = vld [vmem:[%s289 + $0x68] sm:$0xff]
      %v313 = vld [vmem:[%s289 + $0x70] sm:$0xff]
      %v314 = vld [vmem:[%s289 + $0x78] sm:$0xff]
      %v315 = vpack.c.bf16 %v300, %v299
      %v316 = vpack.c.bf16 %v302, %v301
      %v317 = vpack.c.bf16 %v304, %v303
      %v318 = vpack.c.bf16 %v306, %v305
      %v319 = vpack.c.bf16 %v308, %v307
      %v320 = vpack.c.bf16 %v310, %v309
      %v321 = vpack.c.bf16 %v312, %v311
      %v322 = vpack.c.bf16 %v314, %v313
      %v323 = vld [vmem:[%s1] sm:$0xff]
      %v324 = vld [vmem:[%s1 + $0x8] sm:$0xff]
      %v325 = vld [vmem:[%s1 + $0x10] sm:$0xff]
      %v326 = vld [vmem:[%s1 + $0x18] sm:$0xff]
      %v327 = vld [vmem:[%s1 + $0x20] sm:$0xff]
      %v328 = vld [vmem:[%s1 + $0x28] sm:$0xff]
      %v329 = vld [vmem:[%s1 + $0x30] sm:$0xff]
      %v330 = vld [vmem:[%s1 + $0x38] sm:$0xff]
      %v331 = vld [vmem:[%s2] sm:$0x3]
      %v333 = vlaneseq
      %v334 = vshrl.u32 %v333, 7
      %v335 = vsub.s32 0, %v334
      %v336 = vrot.slane %v331, %v335
      %v337 = vlaneseq
      %v338 = vshrl.u32 %v337, 7
      %v339 = vsub.s32 1, %v338
      %v340 = vrot.slane %v331, %v339
      %v351 = vunpack.c.l.b16 %v323
      %v352 = vunpack.c.h.b16 %v323
      %v353 = vunpack.c.l.b16 %v324
      %v354 = vunpack.c.h.b16 %v324
      %v355 = vunpack.c.l.b16 %v325
      %v356 = vunpack.c.h.b16 %v325
      %v357 = vunpack.c.l.b16 %v326
      %v358 = vunpack.c.h.b16 %v326
      %v359 = vunpack.c.l.b16 %v327
      %v360 = vunpack.c.h.b16 %v327
      %v361 = vunpack.c.l.b16 %v328
      %v362 = vunpack.c.h.b16 %v328
      %v363 = vunpack.c.l.b16 %v329
      %v364 = vunpack.c.h.b16 %v329
      %v365 = vunpack.c.l.b16 %v330
      %v366 = vunpack.c.h.b16 %v330
      %v367 = vpack.c.b16 %v353, %v351
      %v368 = vpack.c.b16 %v354, %v352
      %v369 = vpack.c.b16 %v357, %v355
      %v370 = vpack.c.b16 %v358, %v356
      %v371 = vpack.c.b16 %v361, %v359
      %v372 = vpack.c.b16 %v362, %v360
      %v373 = vpack.c.b16 %v365, %v363
      %v374 = vpack.c.b16 %v366, %v364
      %vm383 = vcmask 523264
      %v385 = vsel %vm383, %v315, 0
      %v388 = vsel %vm383, %v316, 0
      %v391 = vsel %vm383, %v317, 0
      %v394 = vsel %vm383, %v318, 0
      %v397 = vsel %vm383, %v319, 0
      %v400 = vsel %vm383, %v320, 0
      %v403 = vsel %vm383, %v321, 0
      %v406 = vsel %vm383, %v322, 0
      %408 = vmatprep.subr.bf16.mxu0 %v368
      %409 = vmatpush1.bf16.msra.mxu0 %v367
      %410 = vmatprep.subr.bf16.mxu0 %v370
      %411 = vmatpush1.bf16.msra.mxu0 %v369
      %412 = vmatprep.subr.bf16.mxu0 %v372
      %413 = vmatpush1.bf16.msra.mxu0 %v371
      %414 = vmatprep.subr.bf16.mxu0 %v374
      %415 = vmatpush1.bf16.msra.mxu0 %v373
      %416 = vmatprep.subr.bf16.mxu0 0
      %417 = vmatpush1.bf16.msra.mxu0 0
      %418 = vmatprep.subr.bf16.mxu0 0
      %419 = vmatpush1.bf16.msra.mxu0 0
      %420 = vmatprep.subr.bf16.mxu0 0
      %421 = vmatpush1.bf16.msra.mxu0 0
      %422 = vmatprep.subr.bf16.mxu0 0
      %423 = vmatpush1.bf16.msra.mxu0 0
      %424 = vmatprep.subr.bf16.mxu0 0
      %425 = vmatpush1.bf16.msra.mxu0 0
      %426 = vmatprep.subr.bf16.mxu0 0
      %427 = vmatpush1.bf16.msra.mxu0 0
      %428 = vmatprep.subr.bf16.mxu0 0
      %429 = vmatpush1.bf16.msra.mxu0 0
      %430 = vmatprep.subr.bf16.mxu0 0
      %431 = vmatpush1.bf16.msra.mxu0 0
      %432 = vmatprep.subr.bf16.mxu0 0
      %433 = vmatpush1.bf16.msra.mxu0 0
      %434 = vmatprep.subr.bf16.mxu0 0
      %435 = vmatpush1.bf16.msra.mxu0 0
      %436 = vmatprep.subr.bf16.mxu0 0
      %437 = vmatpush1.bf16.msra.mxu0 0
      %438 = vmatprep.subr.bf16.mxu0 0
      %439 = vmatpush1.bf16.msra.mxu0 0
      %440 = vmatprep.mubr.bf16.mxu0 0
      %441 = vmatmul.mubr.bf16.gmra.mrb[0].mxu0 %v385
      %v442 = vpop.f32.mrb[0].mxu0
      %v443 = vadd.f32 %v336, %v442
      %v444 = vpop.f32.mrb[0].mxu0
      %v445 = vadd.f32 %v340, %v444
      %v446 = vpop.f32.mrb[0].mxu0
      %v447 = vadd.f32 %v336, %v446
      %v448 = vpop.f32.mrb[0].mxu0
      %v449 = vadd.f32 %v340, %v448
      %450 = vmatprep.mubr.bf16.mxu0 0
      %451 = vmatmul.mubr.bf16.gmra.mrb[0].mxu0 %v388
      %v452 = vpop.f32.mrb[0].mxu0
      %v453 = vadd.f32 %v336, %v452
      %v454 = vpop.f32.mrb[0].mxu0
      %v455 = vadd.f32 %v340, %v454
      %v456 = vpop.f32.mrb[0].mxu0
      %v457 = vadd.f32 %v336, %v456
      %v458 = vpop.f32.mrb[0].mxu0
      %v459 = vadd.f32 %v340, %v458
      %460 = vmatprep.mubr.bf16.mxu0 0
      %461 = vmatmul.mubr.bf16.gmra.mrb[0].mxu0 %v391
      %v462 = vpop.f32.mrb[0].mxu0
      %v463 = vadd.f32 %v336, %v462
      %v464 = vpop.f32.mrb[0].mxu0
      %v465 = vadd.f32 %v340, %v464
      %v466 = vpop.f32.mrb[0].mxu0
      %v467 = vadd.f32 %v336, %v466
      %v468 = vpop.f32.mrb[0].mxu0
      %v469 = vadd.f32 %v340, %v468
      %470 = vmatprep.mubr.bf16.mxu0 0
      %471 = vmatmul.mubr.bf16.gmra.mrb[0].mxu0 %v394
      %v472 = vpop.f32.mrb[0].mxu0
      %v473 = vadd.f32 %v336, %v472
      %v474 = vpop.f32.mrb[0].mxu0
      %v475 = vadd.f32 %v340, %v474
      %v476 = vpop.f32.mrb[0].mxu0
      %v477 = vadd.f32 %v336, %v476
      %v478 = vpop.f32.mrb[0].mxu0
      %v479 = vadd.f32 %v340, %v478
      %480 = vmatprep.mubr.bf16.mxu0 0
      %481 = vmatmul.mubr.bf16.gmra.mrb[0].mxu0 %v397
      %v482 = vpop.f32.mrb[0].mxu0
      %v483 = vadd.f32 %v336, %v482
      %v484 = vpop.f32.mrb[0].mxu0
      %v485 = vadd.f32 %v340, %v484
      %v486 = vpop.f32.mrb[0].mxu0
      %v487 = vadd.f32 %v336, %v486
      %v488 = vpop.f32.mrb[0].mxu0
      %v489 = vadd.f32 %v340, %v488
      %490 = vmatprep.mubr.bf16.mxu0 0
      %491 = vmatmul.mubr.bf16.gmra.mrb[0].mxu0 %v400
      %v492 = vpop.f32.mrb[0].mxu0
      %v493 = vadd.f32 %v336, %v492
      %v494 = vpop.f32.mrb[0].mxu0
      %v495 = vadd.f32 %v340, %v494
      %v496 = vpop.f32.mrb[0].mxu0
      %v497 = vadd.f32 %v336, %v496
      %v498 = vpop.f32.mrb[0].mxu0
      %v499 = vadd.f32 %v340, %v498
      %500 = vmatprep.mubr.bf16.mxu0 0
      %501 = vmatmul.mubr.bf16.gmra.mrb[0].mxu0 %v403
      %v502 = vpop.f32.mrb[0].mxu0
      %v503 = vadd.f32 %v336, %v502
      %v504 = vpop.f32.mrb[0].mxu0
      %v505 = vadd.f32 %v340, %v504
      %v506 = vpop.f32.mrb[0].mxu0
      %v507 = vadd.f32 %v336, %v506
      %v508 = vpop.f32.mrb[0].mxu0
      %v509 = vadd.f32 %v340, %v508
      %510 = vmatprep.mubr.bf16.mxu0 0
      %511 = vmatmul.mubr.bf16.gmra.mrb[0].mxu0 %v406
      %v512 = vpop.f32.mrb[0].mxu0
      %v513 = vadd.f32 %v336, %v512
      %v514 = vpop.f32.mrb[0].mxu0
      %v515 = vadd.f32 %v340, %v514
      %v516 = vpop.f32.mrb[0].mxu0
      %v517 = vadd.f32 %v336, %v516
      %v518 = vpop.f32.mrb[0].mxu0
      %v519 = vadd.f32 %v340, %v518
      %520 = vdwg.mxu0
      %v521 = vmax.f32 %v443, 0.0
      %v522 = vmax.f32 %v445, 0.0
      %v523 = vmax.f32 %v447, 0.0
      %v524 = vmax.f32 %v449, 0.0
      %v525 = vmax.f32 %v453, 0.0
      %v526 = vmax.f32 %v455, 0.0
      %v527 = vmax.f32 %v457, 0.0
      %v528 = vmax.f32 %v459, 0.0
      %v529 = vmax.f32 %v463, 0.0
      %v530 = vmax.f32 %v465, 0.0
      %v531 = vmax.f32 %v467, 0.0
      %v532 = vmax.f32 %v469, 0.0
      %v533 = vmax.f32 %v473, 0.0
      %v534 = vmax.f32 %v475, 0.0
      %v535 = vmax.f32 %v477, 0.0
      %v536 = vmax.f32 %v479, 0.0
      %v537 = vmax.f32 %v483, 0.0
      %v538 = vmax.f32 %v485, 0.0
      %v539 = vmax.f32 %v487, 0.0
      %v540 = vmax.f32 %v489, 0.0
      %v541 = vmax.f32 %v493, 0.0
      %v542 = vmax.f32 %v495, 0.0
      %v543 = vmax.f32 %v497, 0.0
      %v544 = vmax.f32 %v499, 0.0
      %v545 = vmax.f32 %v503, 0.0
      %v546 = vmax.f32 %v505, 0.0
      %v547 = vmax.f32 %v507, 0.0
      %v548 = vmax.f32 %v509, 0.0
      %v549 = vmax.f32 %v513, 0.0
      %v550 = vmax.f32 %v515, 0.0
      %v551 = vmax.f32 %v517, 0.0
      %v552 = vmax.f32 %v519, 0.0
      %v553 = vpack.c.bf16 %v523, %v521
      %v554 = vpack.c.bf16 %v524, %v522
      %v555 = vpack.c.bf16 %v527, %v525
      %v556 = vpack.c.bf16 %v528, %v526
      %v557 = vpack.c.bf16 %v531, %v529
      %v558 = vpack.c.bf16 %v532, %v530
      %v559 = vpack.c.bf16 %v535, %v533
      %v560 = vpack.c.bf16 %v536, %v534
      %v561 = vpack.c.bf16 %v539, %v537
      %v562 = vpack.c.bf16 %v540, %v538
      %v563 = vpack.c.bf16 %v543, %v541
      %v564 = vpack.c.bf16 %v544, %v542
      %v565 = vpack.c.bf16 %v547, %v545
      %v566 = vpack.c.bf16 %v548, %v546
      %v567 = vpack.c.bf16 %v551, %v549
      %v568 = vpack.c.bf16 %v552, %v550
      %v569 = vld [vmem:[%s3] sm:$0xff]
      %v570 = vld [vmem:[%s3 + $0x8] sm:$0xff]
      %v571 = vld [vmem:[%s3 + $0x10] sm:$0xff]
      %v572 = vld [vmem:[%s3 + $0x18] sm:$0xff]
      %v573 = vld [vmem:[%s3 + $0x20] sm:$0xff]
      %v574 = vld [vmem:[%s3 + $0x28] sm:$0xff]
      %v575 = vld [vmem:[%s3 + $0x30] sm:$0xff]
      %v576 = vld [vmem:[%s3 + $0x38] sm:$0xff]
      %v577 = vld [vmem:[%s3 + $0x40] sm:$0xff]
      %v578 = vld [vmem:[%s3 + $0x48] sm:$0xff]
      %v579 = vld [vmem:[%s3 + $0x50] sm:$0xff]
      %v580 = vld [vmem:[%s3 + $0x58] sm:$0xff]
      %v581 = vld [vmem:[%s3 + $0x60] sm:$0xff]
      %v582 = vld [vmem:[%s3 + $0x68] sm:$0xff]
      %v583 = vld [vmem:[%s3 + $0x70] sm:$0xff]
      %v584 = vld [vmem:[%s3 + $0x78] sm:$0xff]
      %v585 = vld [vmem:[%s3 + $0x80] sm:$0xff]
      %v586 = vld [vmem:[%s3 + $0x88] sm:$0xff]
      %v587 = vld [vmem:[%s3 + $0x90] sm:$0xff]
      %v588 = vld [vmem:[%s3 + $0x98] sm:$0xff]
      %v589 = vld [vmem:[%s3 + $0xa0] sm:$0xff]
      %v590 = vld [vmem:[%s3 + $0xa8] sm:$0xff]
      %v591 = vld [vmem:[%s3 + $0xb0] sm:$0xff]
      %v592 = vld [vmem:[%s3 + $0xb8] sm:$0xff]
      %v593 = vld [vmem:[%s3 + $0xc0] sm:$0xff]
      %v594 = vld [vmem:[%s3 + $0xc8] sm:$0xff]
      %v595 = vld [vmem:[%s3 + $0xd0] sm:$0xff]
      %v596 = vld [vmem:[%s3 + $0xd8] sm:$0xff]
      %v597 = vld [vmem:[%s3 + $0xe0] sm:$0xff]
      %v598 = vld [vmem:[%s3 + $0xe8] sm:$0xff]
      %v599 = vld [vmem:[%s3 + $0xf0] sm:$0xff]
      %v600 = vld [vmem:[%s3 + $0xf8] sm:$0xff]
      %v601 = vld [vmem:[%s4] sm:$0x3]
      %v603 = vlaneseq
      %v604 = vshrl.u32 %v603, 7
      %v605 = vsub.s32 0, %v604
      %v606 = vrot.slane %v601, %v605
      %v607 = vlaneseq
      %v608 = vshrl.u32 %v607, 7
      %v609 = vsub.s32 1, %v608
      %v610 = vrot.slane %v601, %v609
      %v645 = vunpack.c.l.b16 %v569
      %v646 = vunpack.c.h.b16 %v569
      %v647 = vunpack.c.l.b16 %v570
      %v648 = vunpack.c.h.b16 %v570
      %v649 = vunpack.c.l.b16 %v571
      %v650 = vunpack.c.h.b16 %v571
      %v651 = vunpack.c.l.b16 %v572
      %v652 = vunpack.c.h.b16 %v572
      %v653 = vunpack.c.l.b16 %v573
      %v654 = vunpack.c.h.b16 %v573
      %v655 = vunpack.c.l.b16 %v574
      %v656 = vunpack.c.h.b16 %v574
      %v657 = vunpack.c.l.b16 %v575
      %v658 = vunpack.c.h.b16 %v575
      %v659 = vunpack.c.l.b16 %v576
      %v660 = vunpack.c.h.b16 %v576
      %v661 = vunpack.c.l.b16 %v577
      %v662 = vunpack.c.h.b16 %v577
      %v663 = vunpack.c.l.b16 %v578
      %v664 = vunpack.c.h.b16 %v578
      %v665 = vunpack.c.l.b16 %v579
      %v666 = vunpack.c.h.b16 %v579
      %v667 = vunpack.c.l.b16 %v580
      %v668 = vunpack.c.h.b16 %v580
      %v669 = vunpack.c.l.b16 %v581
      %v670 = vunpack.c.h.b16 %v581
      %v671 = vunpack.c.l.b16 %v582
      %v672 = vunpack.c.h.b16 %v582
      %v673 = vunpack.c.l.b16 %v583
      %v674 = vunpack.c.h.b16 %v583
      %v675 = vunpack.c.l.b16 %v584
      %v676 = vunpack.c.h.b16 %v584
      %v677 = vunpack.c.l.b16 %v585
      %v678 = vunpack.c.h.b16 %v585
      %v679 = vunpack.c.l.b16 %v586
      %v680 = vunpack.c.h.b16 %v586
      %v681 = vunpack.c.l.b16 %v587
      %v682 = vunpack.c.h.b16 %v587
      %v683 = vunpack.c.l.b16 %v588
      %v684 = vunpack.c.h.b16 %v588
      %v685 = vunpack.c.l.b16 %v589
      %v686 = vunpack.c.h.b16 %v589
      %v687 = vunpack.c.l.b16 %v590
      %v688 = vunpack.c.h.b16 %v590
      %v689 = vunpack.c.l.b16 %v591
      %v690 = vunpack.c.h.b16 %v591
      %v691 = vunpack.c.l.b16 %v592
      %v692 = vunpack.c.h.b16 %v592
      %v693 = vunpack.c.l.b16 %v593
      %v694 = vunpack.c.h.b16 %v593
      %v695 = vunpack.c.l.b16 %v594
      %v696 = vunpack.c.h.b16 %v594
      %v697 = vunpack.c.l.b16 %v595
      %v698 = vunpack.c.h.b16 %v595
      %v699 = vunpack.c.l.b16 %v596
      %v700 = vunpack.c.h.b16 %v596
      %v701 = vunpack.c.l.b16 %v597
      %v702 = vunpack.c.h.b16 %v597
      %v703 = vunpack.c.l.b16 %v598
      %v704 = vunpack.c.h.b16 %v598
      %v705 = vunpack.c.l.b16 %v599
      %v706 = vunpack.c.h.b16 %v599
      %v707 = vunpack.c.l.b16 %v600
      %v708 = vunpack.c.h.b16 %v600
      %v709 = vpack.c.b16 %v647, %v645
      %v710 = vpack.c.b16 %v648, %v646
      %v711 = vpack.c.b16 %v651, %v649
      %v712 = vpack.c.b16 %v652, %v650
      %v713 = vpack.c.b16 %v655, %v653
      %v714 = vpack.c.b16 %v656, %v654
      %v715 = vpack.c.b16 %v659, %v657
      %v716 = vpack.c.b16 %v660, %v658
      %v717 = vpack.c.b16 %v663, %v661
      %v718 = vpack.c.b16 %v664, %v662
      %v719 = vpack.c.b16 %v667, %v665
      %v720 = vpack.c.b16 %v668, %v666
      %v721 = vpack.c.b16 %v671, %v669
      %v722 = vpack.c.b16 %v672, %v670
      %v723 = vpack.c.b16 %v675, %v673
      %v724 = vpack.c.b16 %v676, %v674
      %v725 = vpack.c.b16 %v679, %v677
      %v726 = vpack.c.b16 %v680, %v678
      %v727 = vpack.c.b16 %v683, %v681
      %v728 = vpack.c.b16 %v684, %v682
      %v729 = vpack.c.b16 %v687, %v685
      %v730 = vpack.c.b16 %v688, %v686
      %v731 = vpack.c.b16 %v691, %v689
      %v732 = vpack.c.b16 %v692, %v690
      %v733 = vpack.c.b16 %v695, %v693
      %v734 = vpack.c.b16 %v696, %v694
      %v735 = vpack.c.b16 %v699, %v697
      %v736 = vpack.c.b16 %v700, %v698
      %v737 = vpack.c.b16 %v703, %v701
      %v738 = vpack.c.b16 %v704, %v702
      %v739 = vpack.c.b16 %v707, %v705
      %v740 = vpack.c.b16 %v708, %v706
      %773 = vmatprep.subr.bf16.mxu0 %v710
      %774 = vmatpush1.bf16.msra.mxu0 %v709
      %775 = vmatprep.subr.bf16.mxu0 %v712
      %776 = vmatpush1.bf16.msra.mxu0 %v711
      %777 = vmatprep.subr.bf16.mxu0 %v714
      %778 = vmatpush1.bf16.msra.mxu0 %v713
      %779 = vmatprep.subr.bf16.mxu0 %v716
      %780 = vmatpush1.bf16.msra.mxu0 %v715
      %781 = vmatprep.subr.bf16.mxu0 %v718
      %782 = vmatpush1.bf16.msra.mxu0 %v717
      %783 = vmatprep.subr.bf16.mxu0 %v720
      %784 = vmatpush1.bf16.msra.mxu0 %v719
      %785 = vmatprep.subr.bf16.mxu0 %v722
      %786 = vmatpush1.bf16.msra.mxu0 %v721
      %787 = vmatprep.subr.bf16.mxu0 %v724
      %788 = vmatpush1.bf16.msra.mxu0 %v723
      %789 = vmatprep.subr.bf16.mxu0 %v726
      %790 = vmatpush1.bf16.msra.mxu0 %v725
      %791 = vmatprep.subr.bf16.mxu0 %v728
      %792 = vmatpush1.bf16.msra.mxu0 %v727
      %793 = vmatprep.subr.bf16.mxu0 %v730
      %794 = vmatpush1.bf16.msra.mxu0 %v729
      %795 = vmatprep.subr.bf16.mxu0 %v732
      %796 = vmatpush1.bf16.msra.mxu0 %v731
      %797 = vmatprep.subr.bf16.mxu0 %v734
      %798 = vmatpush1.bf16.msra.mxu0 %v733
      %799 = vmatprep.subr.bf16.mxu0 %v736
      %800 = vmatpush1.bf16.msra.mxu0 %v735
      %801 = vmatprep.subr.bf16.mxu0 %v738
      %802 = vmatpush1.bf16.msra.mxu0 %v737
      %803 = vmatprep.subr.bf16.mxu0 %v740
      %804 = vmatpush1.bf16.msra.mxu0 %v739
      %805 = vmatprep.mubr.bf16.mxu0 %v554
      %806 = vmatmul.mubr.bf16.gmra.mrb[0].mxu0 %v553
      %v807 = vpop.f32.mrb[0].mxu0
      %v808 = vadd.f32 %v606, %v807
      %v809 = vpop.f32.mrb[0].mxu0
      %v810 = vadd.f32 %v610, %v809
      %v811 = vpop.f32.mrb[0].mxu0
      %v812 = vadd.f32 %v606, %v811
      %v813 = vpop.f32.mrb[0].mxu0
      %v814 = vadd.f32 %v610, %v813
      %815 = vmatprep.mubr.bf16.mxu0 %v556
      %816 = vmatmul.mubr.bf16.gmra.mrb[0].mxu0 %v555
      %v817 = vpop.f32.mrb[0].mxu0
      %v818 = vadd.f32 %v606, %v817
      %v819 = vpop.f32.mrb[0].mxu0
      %v820 = vadd.f32 %v610, %v819
      %v821 = vpop.f32.mrb[0].mxu0
      %v822 = vadd.f32 %v606, %v821
      %v823 = vpop.f32.mrb[0].mxu0
      %v824 = vadd.f32 %v610, %v823
      %825 = vmatprep.mubr.bf16.mxu0 %v558
      %826 = vmatmul.mubr.bf16.gmra.mrb[0].mxu0 %v557
      %v827 = vpop.f32.mrb[0].mxu0
      %v828 = vadd.f32 %v606, %v827
      %v829 = vpop.f32.mrb[0].mxu0
      %v830 = vadd.f32 %v610, %v829
      %v831 = vpop.f32.mrb[0].mxu0
      %v832 = vadd.f32 %v606, %v831
      %v833 = vpop.f32.mrb[0].mxu0
      %v834 = vadd.f32 %v610, %v833
      %835 = vmatprep.mubr.bf16.mxu0 %v560
      %836 = vmatmul.mubr.bf16.gmra.mrb[0].mxu0 %v559
      %v837 = vpop.f32.mrb[0].mxu0
      %v838 = vadd.f32 %v606, %v837
      %v839 = vpop.f32.mrb[0].mxu0
      %v840 = vadd.f32 %v610, %v839
      %v841 = vpop.f32.mrb[0].mxu0
      %v842 = vadd.f32 %v606, %v841
      %v843 = vpop.f32.mrb[0].mxu0
      %v844 = vadd.f32 %v610, %v843
      %845 = vmatprep.mubr.bf16.mxu0 %v562
      %846 = vmatmul.mubr.bf16.gmra.mrb[0].mxu0 %v561
      %v847 = vpop.f32.mrb[0].mxu0
      %v848 = vadd.f32 %v606, %v847
      %v849 = vpop.f32.mrb[0].mxu0
      %v850 = vadd.f32 %v610, %v849
      %v851 = vpop.f32.mrb[0].mxu0
      %v852 = vadd.f32 %v606, %v851
      %v853 = vpop.f32.mrb[0].mxu0
      %v854 = vadd.f32 %v610, %v853
      %855 = vmatprep.mubr.bf16.mxu0 %v564
      %856 = vmatmul.mubr.bf16.gmra.mrb[0].mxu0 %v563
      %v857 = vpop.f32.mrb[0].mxu0
      %v858 = vadd.f32 %v606, %v857
      %v859 = vpop.f32.mrb[0].mxu0
      %v860 = vadd.f32 %v610, %v859
      %v861 = vpop.f32.mrb[0].mxu0
      %v862 = vadd.f32 %v606, %v861
      %v863 = vpop.f32.mrb[0].mxu0
      %v864 = vadd.f32 %v610, %v863
      %865 = vmatprep.mubr.bf16.mxu0 %v566
      %866 = vmatmul.mubr.bf16.gmra.mrb[0].mxu0 %v565
      %v867 = vpop.f32.mrb[0].mxu0
      %v868 = vadd.f32 %v606, %v867
      %v869 = vpop.f32.mrb[0].mxu0
      %v870 = vadd.f32 %v610, %v869
      %v871 = vpop.f32.mrb[0].mxu0
      %v872 = vadd.f32 %v606, %v871
      %v873 = vpop.f32.mrb[0].mxu0
      %v874 = vadd.f32 %v610, %v873
      %875 = vmatprep.mubr.bf16.mxu0 %v568
      %876 = vmatmul.mubr.bf16.gmra.mrb[0].mxu0 %v567
      %v877 = vpop.f32.mrb[0].mxu0
      %v878 = vadd.f32 %v606, %v877
      %v879 = vpop.f32.mrb[0].mxu0
      %v880 = vadd.f32 %v610, %v879
      %v881 = vpop.f32.mrb[0].mxu0
      %v882 = vadd.f32 %v606, %v881
      %v883 = vpop.f32.mrb[0].mxu0
      %v884 = vadd.f32 %v610, %v883
      %885 = vdwg.mxu0
      %v886 = vmax.f32 %v808, 0.0
      %v887 = vmax.f32 %v810, 0.0
      %v888 = vmax.f32 %v812, 0.0
      %v889 = vmax.f32 %v814, 0.0
      %v890 = vmax.f32 %v818, 0.0
      %v891 = vmax.f32 %v820, 0.0
      %v892 = vmax.f32 %v822, 0.0
      %v893 = vmax.f32 %v824, 0.0
      %v894 = vmax.f32 %v828, 0.0
      %v895 = vmax.f32 %v830, 0.0
      %v896 = vmax.f32 %v832, 0.0
      %v897 = vmax.f32 %v834, 0.0
      %v898 = vmax.f32 %v838, 0.0
      %v899 = vmax.f32 %v840, 0.0
      %v900 = vmax.f32 %v842, 0.0
      %v901 = vmax.f32 %v844, 0.0
      %v902 = vmax.f32 %v848, 0.0
      %v903 = vmax.f32 %v850, 0.0
      %v904 = vmax.f32 %v852, 0.0
      %v905 = vmax.f32 %v854, 0.0
      %v906 = vmax.f32 %v858, 0.0
      %v907 = vmax.f32 %v860, 0.0
      %v908 = vmax.f32 %v862, 0.0
      %v909 = vmax.f32 %v864, 0.0
      %v910 = vmax.f32 %v868, 0.0
      %v911 = vmax.f32 %v870, 0.0
      %v912 = vmax.f32 %v872, 0.0
      %v913 = vmax.f32 %v874, 0.0
      %v914 = vmax.f32 %v878, 0.0
      %v915 = vmax.f32 %v880, 0.0
      %v916 = vmax.f32 %v882, 0.0
      %v917 = vmax.f32 %v884, 0.0
      %v918 = vld [vmem:[%s5] sm:$0xff]
      %v919 = vpack.c.bf16 %v888, %v886
      %v920 = vpack.c.bf16 %v889, %v887
      %v921 = vpack.c.bf16 %v892, %v890
      %v922 = vpack.c.bf16 %v893, %v891
      %v923 = vpack.c.bf16 %v896, %v894
      %v924 = vpack.c.bf16 %v897, %v895
      %v925 = vpack.c.bf16 %v900, %v898
      %v926 = vpack.c.bf16 %v901, %v899
      %v927 = vpack.c.bf16 %v904, %v902
      %v928 = vpack.c.bf16 %v905, %v903
      %v929 = vpack.c.bf16 %v908, %v906
      %v930 = vpack.c.bf16 %v909, %v907
      %v931 = vpack.c.bf16 %v912, %v910
      %v932 = vpack.c.bf16 %v913, %v911
      %v933 = vpack.c.bf16 %v916, %v914
      %v934 = vpack.c.bf16 %v917, %v915
      %v936 = vunpack.c.l.b16 %v918
      %v937 = vunpack.c.h.b16 %v918
      %v938 = vpack.c.b16 %v936, %v936
      %v939 = vpack.c.b16 %v937, %v937
      %942 = vmatprep.subr.bf16.mxu0 %v920
      %943 = vmatpush1.bf16.xpose.msra.mxu0 %v919
      %944 = vmatprep.subr.bf16.mxu0 %v922
      %945 = vmatpush1.bf16.xpose.msra.mxu0 %v921
      %946 = vmatprep.subr.bf16.mxu0 %v924
      %947 = vmatpush1.bf16.xpose.msra.mxu0 %v923
      %948 = vmatprep.subr.bf16.mxu0 %v926
      %949 = vmatpush1.bf16.xpose.msra.mxu0 %v925
      %950 = vmatprep.subr.bf16.mxu0 %v928
      %951 = vmatpush1.bf16.xpose.msra.mxu0 %v927
      %952 = vmatprep.subr.bf16.mxu0 %v930
      %953 = vmatpush1.bf16.xpose.msra.mxu0 %v929
      %954 = vmatprep.subr.bf16.mxu0 %v932
      %955 = vmatpush1.bf16.xpose.msra.mxu0 %v931
      %956 = vmatprep.subr.bf16.mxu0 %v934
      %957 = vmatpush1.bf16.xpose.msra.mxu0 %v933
      %958 = vmatprep.subr.bf16.mxu0 0
      %959 = vmatpush1.bf16.xpose.msra.mxu0 0
      %960 = vmatprep.subr.bf16.mxu0 0
      %961 = vmatpush1.bf16.xpose.msra.mxu0 0
      %962 = vmatprep.subr.bf16.mxu0 0
      %963 = vmatpush1.bf16.xpose.msra.mxu0 0
      %964 = vmatprep.subr.bf16.mxu0 0
      %965 = vmatpush1.bf16.xpose.msra.mxu0 0
      %966 = vmatprep.subr.bf16.mxu0 0
      %967 = vmatpush1.bf16.xpose.msra.mxu0 0
      %968 = vmatprep.subr.bf16.mxu0 0
      %969 = vmatpush1.bf16.xpose.msra.mxu0 0
      %970 = vmatprep.subr.bf16.mxu0 0
      %971 = vmatpush1.bf16.xpose.msra.mxu0 0
      %972 = vmatprep.subr.bf16.mxu0 0
      %973 = vmatpush1.bf16.xpose.msra.mxu0 0
      %974 = vmatprep.mubr.bf16.mxu0 %v939
      %975 = vmatmul.mubr.bf16.gmra.mrb[0].mxu0 %v938
      %v976 = vpop.f32.mrb[0].mxu0
      %v977 = vadd.f32 0.0, %v976
      %v978 = vpop.f32.mrb[0].mxu0
      %v979 = vpop.f32.mrb[0].mxu0
      %v980 = vpop.f32.mrb[0].mxu0
      %981 = vdwg.mxu0
      %s982 = sld [smem:[#allocation2]]
      %v983 = vstv %s982
      %v984 = vadd.f32 %v977, %v983
      %v985 = vxor.u32 %v984, 2147483648
      %v986 = vmul.f32 %v985, 1.442695
      %v987 = vpow.pop %v986
      %v988 = vadd.f32 %v987, 1.0
      %v989 = vrcp.pop %v988
      %v990 = vmul.f32 1.0, %v989
      %991 = vst [vmem:[%s297] sm:$0x1] %v990
      %p992 = scmp.lt.s32.totalorder %s19, 2
      %s993 = scalar_select %p992, %s19, 2
      %s994 = scalar_lea.vmem %s7, %s993
      // Predicated region
      $region49: #{adversarial_network_forward.1} parent=47 // pred_check
        %p995 = pneg %p189
      $region50: #{adversarial_network_forward.1} parent=47 // pred_check_branch
        %997 = sbr.rel (%p995) target = $region52
      $region51: #{adversarial_network_forward.1} parent=47 // pred_region
        _
      $region52: #{adversarial_network_forward.1} parent=47 // pred_fallthru
        _
    $region48: #{adversarial_network_forward.1} parent=5 // pred_fallthru
      _
    %p998 = scmp.le.s32.totalorder 2, %s14
    // Predicated region
    $region53: #{adversarial_network_forward.1} parent=5 // pred_check
      %p999 = pneg %p998
    $region54: #{adversarial_network_forward.1} parent=5 // pred_check_branch
      %1001 = sbr.rel (%p999) target = $region56
    $region55: #{adversarial_network_forward.1} parent=5 // pred_region
      %s1002 = ssub.s32 %s14, 2
      // Predicated region
      $region57: #{adversarial_network_forward.1} parent=55 // pred_check
        %p1003 = pneg %p195
      $region58: #{adversarial_network_forward.1} parent=55 // pred_check_branch
        %1005 = sbr.rel (%p1003) target = $region60
      $region59: #{adversarial_network_forward.1} parent=55 // pred_region
        %p1006 = scmp.lt.s32.totalorder %s20, 2
        %s1007 = scalar_select %p1006, %s20, 2
        %s1008 = scalar_lea.vmem %s7, %s1007
      $region60: #{adversarial_network_forward.1} parent=55 // pred_fallthru
        _
    $region56: #{adversarial_network_forward.1} parent=5 // pred_fallthru
      _
  $region6: #{adversarial_network_forward.1} parent=0 // loop_footer
    %s18 = sadd.s32 1, %s14
  $region7: #{adversarial_network_forward.1} parent=0 // loop_footer_branch
    %13 = sbr.rel target = $region3
  $region8: #{adversarial_network_forward.1} parent=0 // loop_exit
    _

</llo_original>
